<compile_context>
chip_gen: v5e
topology: v5e:2x2
jax: 0.10.0
libtpu: 0.0.40
codegen_flags: <defaults>
</compile_context>

<pallas_src>
import functools
import math

import numpy as np
import jax
import jax.numpy as jnp
from jax import lax
from jax.experimental import pallas as pl
from jax.experimental.pallas import tpu as pltpu


def _gaussian_1d(window_size: int, sigma: float = 1.5) -> np.ndarray:
    """Normalized 1D Gaussian; matches StructuralSimilarity.gaussian."""
    center = window_size // 2
    g = np.array(
        [math.exp(-((x - center) ** 2) / float(2 * sigma ** 2)) for x in range(window_size)],
        dtype=np.float64,
    )
    return (g / g.sum()).astype(np.float32)


def _toeplitz_row(w: int, w_out: int, g: np.ndarray, pad: int) -> np.ndarray:
    """T[i, j] = g[i - j + pad]; x(w) @ T == zero-padded 1D cross-correlation."""
    k = g.shape[0]
    t = np.zeros((w, w_out), dtype=np.float32)
    for j in range(w_out):
        for dx in range(k):
            i = j + dx - pad
            if 0 <= i < w:
                t[i, j] = g[dx]
    return t


def _toeplitz_col(h: int, h_out: int, g: np.ndarray, pad: int) -> np.ndarray:
    """T[r, i] = g[i - r + pad]; T(h_out,h) @ R(h,:) == zero-padded column conv."""
    k = g.shape[0]
    t = np.zeros((h_out, h), dtype=np.float32)
    for r in range(h_out):
        for dy in range(k):
            i = r + dy - pad
            if 0 <= i < h:
                t[r, i] = g[dy]
    return t


def _ssim_kernel(x1_ref, x2_ref, trow_ref, tcol_ref, out_ref, *, c_blk):
    """One channel-block per grid step; both conv passes are MXU matmuls.

    Channels are processed one at a time (stream-at-a-time) so the live set per
    step stays ~one channel's conv outputs, independent of c_blk.
    """
    t_row = trow_ref[...]                          # (w, w_out)  f32
    t_col = tcol_ref[...]                          # (h_out, h)  f32
    c1 = 0.01 ** 2
    c2 = 0.03 ** 2

    def gconv(a):                                  # separable Gaussian conv on the MXU
        r = jnp.dot(a, t_row, preferred_element_type=jnp.float32)      # (h, w_out)
        return jnp.dot(t_col, r, preferred_element_type=jnp.float32)   # (h_out, w_out)

    acc = None
    for c in range(c_blk):                         # static unroll over channels in block
        x1 = x1_ref[c].astype(jnp.float32)         # (h, w)
        x2 = x2_ref[c].astype(jnp.float32)

        mu1 = gconv(x1)
        mu2 = gconv(x2)
        e11 = gconv(x1 * x1)
        e22 = gconv(x2 * x2)
        e12 = gconv(x1 * x2)

        mu1_sq = mu1 * mu1
        mu2_sq = mu2 * mu2
        mu12 = mu1 * mu2
        sigma1_sq = e11 - mu1_sq
        sigma2_sq = e22 - mu2_sq
        sigma12 = e12 - mu12

        numerator = (2.0 * mu12 + c1) * (2.0 * sigma12 + c2)
        denominator = (mu1_sq + mu2_sq + c1) * (sigma1_sq + sigma2_sq + c2)
        ssim_map = numerator * pl.reciprocal(denominator, approx=True)   # EUP slot

        acc = ssim_map if acc is None else acc + ssim_map

    # One XLU reduce per block; no masking needed (all lanes/channels are valid).
    out_ref[...] = jnp.sum(acc, axis=0, keepdims=True).reshape(1, 1, acc.shape[1])


def structural_similarity(img1, img2, val_range=255, window_size=11):
    """SSIM (size_average=True, full=False path) matching the PyTorch module.

    Note: as in the reference module, `val_range` is effectively unused because
    C1/C2 are hard-coded to 0.01**2 and 0.03**2.
    """
    del val_range
    b, c, h, w = img1.shape
    pad = window_size // 2
    k = min(window_size, h, w)                  # real_size, as in the module
    g = _gaussian_1d(k, 1.5)

    h_out = h + 2 * pad - k + 1
    w_out = w + 2 * pad - k + 1

    t_row = jnp.asarray(_toeplitz_row(w, w_out, g, pad))   # (w, w_out)
    t_col = jnp.asarray(_toeplitz_col(h, h_out, g, pad))   # (h_out, h)

    n = b * c
    x1 = img1.reshape(n, h, w)                  # free reshape; no pad, no dtype cast
    x2 = img2.reshape(n, h, w)

    # ---- per-generation VMEM sizing -------------------------------------
    try:
        phys_vmem = int(getattr(pltpu.get_tpu_info(), "vmem_capacity_bytes"))
    except Exception:
        phys_vmem = 64 * 1024 * 1024            # conservative (v7x per-TensorCore)
    vmem_limit = min(96 * 1024 * 1024, max(32 * 1024 * 1024, (phys_vmem * 3) // 4))

    # ---- channel-block sizing --------------------------------------------
    itemsize = jnp.dtype(img1.dtype).itemsize
    in_bytes = h * w * itemsize
    # rough live f32 bytes per channel inside one step (inputs, products, row
    # results, 5 conv outputs, epilogue temps)
    per_chan = 4 * (6 * h * w + 4 * h * w_out + 10 * h_out * w_out)
    toep_bytes = 4 * (w * w_out + h * h_out)
    budget = int(vmem_limit * 0.6) - toep_bytes
    cap_mem = max(1, budget // max(1, 4 * in_bytes + per_chan))   # 2 inputs x 2 buffers
    cap_steps = max(1, n // 4)                  # keep >= 4 grid steps when possible
    cap = max(1, min(cap_mem, cap_steps, 8, n))
    c_blk = 1
    for d in range(1, cap + 1):                 # largest divisor of n <= cap
        if n % d == 0:
            c_blk = d
    num_blocks = n // c_blk

    # TODO(synk): for very large images (per-channel working set > VMEM budget,
    # e.g. 1080p on v7x's 64 MiB), add an H-tiling grid axis with a (k-1)-row
    # halo and split the column Toeplitz per tile; also consider lane-packing
    # several channels when w_out << 128.

    kernel = functools.partial(_ssim_kernel, c_blk=c_blk)

    partials = pl.pallas_call(
        kernel,
        out_shape=jax.ShapeDtypeStruct((num_blocks, 1, w_out), jnp.float32),
        grid=(num_blocks,),
        in_specs=[
            pl.BlockSpec((c_blk, h, w), lambda i: (i, 0, 0)),
            pl.BlockSpec((c_blk, h, w), lambda i: (i, 0, 0)),
            pl.BlockSpec((w, w_out), lambda i: (0, 0)),      # resident (same block idx)
            pl.BlockSpec((h_out, h), lambda i: (0, 0)),      # resident (same block idx)
        ],
        out_specs=pl.BlockSpec((1, 1, w_out), lambda i: (i, 0, 0)),
        compiler_params=pltpu.CompilerParams(
            dimension_semantics=("parallel",),
            vmem_limit_bytes=vmem_limit),
    )(x1, x2, t_row, t_col)

    total = jnp.sum(partials)                   # tiny exact reduce in JAX
    return (total / (n * h_out * w_out)).astype(jnp.float32)


def _ssim_reference(img1, img2, window_size=11):
    """Pure-JAX reference (depthwise conv via lax) for a correctness check."""
    b, c, h, w = img1.shape
    pad = window_size // 2
    real_size = min(window_size, h, w)
    g = jnp.asarray(_gaussian_1d(real_size, 1.5))
    win2d = jnp.outer(g, g).astype(jnp.float32)
    kern = jnp.broadcast_to(win2d, (c, 1, real_size, real_size)).astype(jnp.float32)

    def conv(x):
        return lax.conv_general_dilated(
            x.astype(jnp.float32), kern, window_strides=(1, 1),
            padding=((pad, pad), (pad, pad)),
            dimension_numbers=("NCHW", "OIHW", "NCHW"),
            feature_group_count=c, precision=lax.Precision.HIGHEST)

    mu1, mu2 = conv(img1), conv(img2)
    mu1_sq, mu2_sq, mu12 = mu1 ** 2, mu2 ** 2, mu1 * mu2
    s1 = conv(img1 * img1) - mu1_sq
    s2 = conv(img2 * img2) - mu2_sq
    s12 = conv(img1 * img2) - mu12
    c1, c2 = 0.01 ** 2, 0.03 ** 2
    ssim = ((2 * mu12 + c1) * (2 * s12 + c2)) / ((mu1_sq + mu2_sq + c1) * (s1 + s2 + c2))
    return jnp.mean(ssim)


if __name__ == "__main__":
    key = jax.random.PRNGKey(0)
    k1, k2 = jax.random.split(key)
    B, C, H, W = 2, 4, 16, 16
    img1 = jax.random.uniform(k1, (B, C, H, W), jnp.float32) * 255.0
    img2 = jnp.clip(img1 + 20.0 * jax.random.normal(k2, (B, C, H, W), jnp.float32), 0.0, 255.0)

    out = structural_similarity(img1, img2)
    jax.block_until_ready(out)

    ref = _ssim_reference(img1, img2)
    jax.block_until_ready(ref)
    if not bool(jnp.isfinite(out)) or abs(float(out) - float(ref)) > 1e-3:
        raise AssertionError(f"SSIM mismatch: kernel={float(out)} ref={float(ref)}")

    print("KERNEL_OK")
</pallas_src>

<mosaic_0001>
module attributes {stable_mosaic.version = 11 : i64} {
  func.func @_ssim_kernel(%arg0: i32, %arg1: memref<2x16x16xf32, #tpu.memory_space<vmem>>, %arg2: memref<2x16x16xf32, #tpu.memory_space<vmem>>, %arg3: memref<16x16xf32, #tpu.memory_space<vmem>>, %arg4: memref<16x16xf32, #tpu.memory_space<vmem>>, %arg5: memref<1x1x16xf32, #tpu.memory_space<vmem>>) attributes {dimension_semantics = [#tpu.dimension_semantics<parallel>], iteration_bounds = array<i64: 4>, scalar_prefetch = 0 : i64, scratch_operands = 0 : i64, tpu.core_type = #tpu.core_type<tc>, window_params = [{transform_indices = @transform_0, window_bounds = array<i64: 2, 16, 16>}, {transform_indices = @transform_1, window_bounds = array<i64: 2, 16, 16>}, {pipeline_mode = #tpu.pipeline_mode<synchronous>, transform_indices = @transform_2, window_bounds = array<i64: 16, 16>}, {pipeline_mode = #tpu.pipeline_mode<synchronous>, transform_indices = @transform_3, window_bounds = array<i64: 16, 16>}, {transform_indices = @transform_4, window_bounds = array<i64: 1, 1, 16>}]} {
    %c0 = arith.constant 0 : index
    %c0_0 = arith.constant 0 : index
    %0 = vector.load %arg3[%c0, %c0_0] : memref<16x16xf32, #tpu.memory_space<vmem>>, vector<16x16xf32>
    %c0_1 = arith.constant 0 : index
    %c0_2 = arith.constant 0 : index
    %1 = vector.load %arg4[%c0_1, %c0_2] : memref<16x16xf32, #tpu.memory_space<vmem>>, vector<16x16xf32>
    %c0_3 = arith.constant 0 : index
    %c0_4 = arith.constant 0 : index
    %c0_5 = arith.constant 0 : index
    %2 = vector.load %arg1[%c0_3, %c0_4, %c0_5] : memref<2x16x16xf32, #tpu.memory_space<vmem>>, vector<1x16x16xf32>
    %3 = vector.shape_cast %2 : vector<1x16x16xf32> to vector<16x16xf32>
    %c0_6 = arith.constant 0 : index
    %c0_7 = arith.constant 0 : index
    %c0_8 = arith.constant 0 : index
    %4 = vector.load %arg2[%c0_6, %c0_7, %c0_8] : memref<2x16x16xf32, #tpu.memory_space<vmem>>, vector<1x16x16xf32>
    %5 = vector.shape_cast %4 : vector<1x16x16xf32> to vector<16x16xf32>
    %cst = arith.constant dense<0.000000e+00> : vector<16x16xf32>
    %6 = tpu.matmul %3, %0, %cst {dimension_numbers = #tpu.dot_dimension_numbers<[1], [0], [0], [1], [0, 0, 1, 1], [], []>} : vector<16x16xf32>, vector<16x16xf32>, vector<16x16xf32> -> vector<16x16xf32>
    %cst_9 = arith.constant dense<0.000000e+00> : vector<16x16xf32>
    %7 = tpu.matmul %1, %6, %cst_9 {dimension_numbers = #tpu.dot_dimension_numbers<[1], [0], [0], [1], [0, 0, 1, 1], [], []>} : vector<16x16xf32>, vector<16x16xf32>, vector<16x16xf32> -> vector<16x16xf32>
    %cst_10 = arith.constant dense<0.000000e+00> : vector<16x16xf32>
    %8 = tpu.matmul %5, %0, %cst_10 {dimension_numbers = #tpu.dot_dimension_numbers<[1], [0], [0], [1], [0, 0, 1, 1], [], []>} : vector<16x16xf32>, vector<16x16xf32>, vector<16x16xf32> -> vector<16x16xf32>
    %cst_11 = arith.constant dense<0.000000e+00> : vector<16x16xf32>
    %9 = tpu.matmul %1, %8, %cst_11 {dimension_numbers = #tpu.dot_dimension_numbers<[1], [0], [0], [1], [0, 0, 1, 1], [], []>} : vector<16x16xf32>, vector<16x16xf32>, vector<16x16xf32> -> vector<16x16xf32>
    %10 = arith.mulf %3, %3 : vector<16x16xf32>
    %cst_12 = arith.constant dense<0.000000e+00> : vector<16x16xf32>
    %11 = tpu.matmul %10, %0, %cst_12 {dimension_numbers = #tpu.dot_dimension_numbers<[1], [0], [0], [1], [0, 0, 1, 1], [], []>} : vector<16x16xf32>, vector<16x16xf32>, vector<16x16xf32> -> vector<16x16xf32>
    %cst_13 = arith.constant dense<0.000000e+00> : vector<16x16xf32>
    %12 = tpu.matmul %1, %11, %cst_13 {dimension_numbers = #tpu.dot_dimension_numbers<[1], [0], [0], [1], [0, 0, 1, 1], [], []>} : vector<16x16xf32>, vector<16x16xf32>, vector<16x16xf32> -> vector<16x16xf32>
    %13 = arith.mulf %5, %5 : vector<16x16xf32>
    %cst_14 = arith.constant dense<0.000000e+00> : vector<16x16xf32>
    %14 = tpu.matmul %13, %0, %cst_14 {dimension_numbers = #tpu.dot_dimension_numbers<[1], [0], [0], [1], [0, 0, 1, 1], [], []>} : vector<16x16xf32>, vector<16x16xf32>, vector<16x16xf32> -> vector<16x16xf32>
    %cst_15 = arith.constant dense<0.000000e+00> : vector<16x16xf32>
    %15 = tpu.matmul %1, %14, %cst_15 {dimension_numbers = #tpu.dot_dimension_numbers<[1], [0], [0], [1], [0, 0, 1, 1], [], []>} : vector<16x16xf32>, vector<16x16xf32>, vector<16x16xf32> -> vector<16x16xf32>
    %16 = arith.mulf %3, %5 : vector<16x16xf32>
    %cst_16 = arith.constant dense<0.000000e+00> : vector<16x16xf32>
    %17 = tpu.matmul %16, %0, %cst_16 {dimension_numbers = #tpu.dot_dimension_numbers<[1], [0], [0], [1], [0, 0, 1, 1], [], []>} : vector<16x16xf32>, vector<16x16xf32>, vector<16x16xf32> -> vector<16x16xf32>
    %cst_17 = arith.constant dense<0.000000e+00> : vector<16x16xf32>
    %18 = tpu.matmul %1, %17, %cst_17 {dimension_numbers = #tpu.dot_dimension_numbers<[1], [0], [0], [1], [0, 0, 1, 1], [], []>} : vector<16x16xf32>, vector<16x16xf32>, vector<16x16xf32> -> vector<16x16xf32>
    %19 = arith.mulf %7, %7 : vector<16x16xf32>
    %20 = arith.mulf %9, %9 : vector<16x16xf32>
    %21 = arith.mulf %7, %9 : vector<16x16xf32>
    %22 = arith.subf %12, %19 : vector<16x16xf32>
    %23 = arith.subf %15, %20 : vector<16x16xf32>
    %24 = arith.subf %18, %21 : vector<16x16xf32>
    %cst_18 = arith.constant 2.000000e+00 : f32
    %25 = vector.broadcast %cst_18 : f32 to vector<16x16xf32>
    %26 = arith.mulf %25, %21 : vector<16x16xf32>
    %cst_19 = arith.constant 9.99999974E-5 : f32
    %27 = vector.broadcast %cst_19 : f32 to vector<16x16xf32>
    %28 = arith.addf %26, %27 : vector<16x16xf32>
    %cst_20 = arith.constant 2.000000e+00 : f32
    %29 = vector.broadcast %cst_20 : f32 to vector<16x16xf32>
    %30 = arith.mulf %29, %24 : vector<16x16xf32>
    %cst_21 = arith.constant 8.99999984E-4 : f32
    %31 = vector.broadcast %cst_21 : f32 to vector<16x16xf32>
    %32 = arith.addf %30, %31 : vector<16x16xf32>
    %33 = arith.mulf %28, %32 : vector<16x16xf32>
    %34 = arith.addf %19, %20 : vector<16x16xf32>
    %cst_22 = arith.constant 9.99999974E-5 : f32
    %35 = vector.broadcast %cst_22 : f32 to vector<16x16xf32>
    %36 = arith.addf %34, %35 : vector<16x16xf32>
    %37 = arith.addf %22, %23 : vector<16x16xf32>
    %cst_23 = arith.constant 8.99999984E-4 : f32
    %38 = vector.broadcast %cst_23 : f32 to vector<16x16xf32>
    %39 = arith.addf %37, %38 : vector<16x16xf32>
    %40 = arith.mulf %36, %39 : vector<16x16xf32>
    %41 = tpu.reciprocal %40 {approx = true} : vector<16x16xf32> -> vector<16x16xf32>
    %42 = arith.mulf %33, %41 : vector<16x16xf32>
    %c1 = arith.constant 1 : index
    %c0_24 = arith.constant 0 : index
    %c0_25 = arith.constant 0 : index
    %43 = vector.load %arg1[%c1, %c0_24, %c0_25] : memref<2x16x16xf32, #tpu.memory_space<vmem>>, vector<1x16x16xf32>
    %44 = vector.shape_cast %43 : vector<1x16x16xf32> to vector<16x16xf32>
    %c1_26 = arith.constant 1 : index
    %c0_27 = arith.constant 0 : index
    %c0_28 = arith.constant 0 : index
    %45 = vector.load %arg2[%c1_26, %c0_27, %c0_28] : memref<2x16x16xf32, #tpu.memory_space<vmem>>, vector<1x16x16xf32>
    %46 = vector.shape_cast %45 : vector<1x16x16xf32> to vector<16x16xf32>
    %cst_29 = arith.constant dense<0.000000e+00> : vector<16x16xf32>
    %47 = tpu.matmul %44, %0, %cst_29 {dimension_numbers = #tpu.dot_dimension_numbers<[1], [0], [0], [1], [0, 0, 1, 1], [], []>} : vector<16x16xf32>, vector<16x16xf32>, vector<16x16xf32> -> vector<16x16xf32>
    %cst_30 = arith.constant dense<0.000000e+00> : vector<16x16xf32>
    %48 = tpu.matmul %1, %47, %cst_30 {dimension_numbers = #tpu.dot_dimension_numbers<[1], [0], [0], [1], [0, 0, 1, 1], [], []>} : vector<16x16xf32>, vector<16x16xf32>, vector<16x16xf32> -> vector<16x16xf32>
    %cst_31 = arith.constant dense<0.000000e+00> : vector<16x16xf32>
    %49 = tpu.matmul %46, %0, %cst_31 {dimension_numbers = #tpu.dot_dimension_numbers<[1], [0], [0], [1], [0, 0, 1, 1], [], []>} : vector<16x16xf32>, vector<16x16xf32>, vector<16x16xf32> -> vector<16x16xf32>
    %cst_32 = arith.constant dense<0.000000e+00> : vector<16x16xf32>
    %50 = tpu.matmul %1, %49, %cst_32 {dimension_numbers = #tpu.dot_dimension_numbers<[1], [0], [0], [1], [0, 0, 1, 1], [], []>} : vector<16x16xf32>, vector<16x16xf32>, vector<16x16xf32> -> vector<16x16xf32>
    %51 = arith.mulf %44, %44 : vector<16x16xf32>
    %cst_33 = arith.constant dense<0.000000e+00> : vector<16x16xf32>
    %52 = tpu.matmul %51, %0, %cst_33 {dimension_numbers = #tpu.dot_dimension_numbers<[1], [0], [0], [1], [0, 0, 1, 1], [], []>} : vector<16x16xf32>, vector<16x16xf32>, vector<16x16xf32> -> vector<16x16xf32>
    %cst_34 = arith.constant dense<0.000000e+00> : vector<16x16xf32>
    %53 = tpu.matmul %1, %52, %cst_34 {dimension_numbers = #tpu.dot_dimension_numbers<[1], [0], [0], [1], [0, 0, 1, 1], [], []>} : vector<16x16xf32>, vector<16x16xf32>, vector<16x16xf32> -> vector<16x16xf32>
    %54 = arith.mulf %46, %46 : vector<16x16xf32>
    %cst_35 = arith.constant dense<0.000000e+00> : vector<16x16xf32>
    %55 = tpu.matmul %54, %0, %cst_35 {dimension_numbers = #tpu.dot_dimension_numbers<[1], [0], [0], [1], [0, 0, 1, 1], [], []>} : vector<16x16xf32>, vector<16x16xf32>, vector<16x16xf32> -> vector<16x16xf32>
    %cst_36 = arith.constant dense<0.000000e+00> : vector<16x16xf32>
    %56 = tpu.matmul %1, %55, %cst_36 {dimension_numbers = #tpu.dot_dimension_numbers<[1], [0], [0], [1], [0, 0, 1, 1], [], []>} : vector<16x16xf32>, vector<16x16xf32>, vector<16x16xf32> -> vector<16x16xf32>
    %57 = arith.mulf %44, %46 : vector<16x16xf32>
    %cst_37 = arith.constant dense<0.000000e+00> : vector<16x16xf32>
    %58 = tpu.matmul %57, %0, %cst_37 {dimension_numbers = #tpu.dot_dimension_numbers<[1], [0], [0], [1], [0, 0, 1, 1], [], []>} : vector<16x16xf32>, vector<16x16xf32>, vector<16x16xf32> -> vector<16x16xf32>
    %cst_38 = arith.constant dense<0.000000e+00> : vector<16x16xf32>
    %59 = tpu.matmul %1, %58, %cst_38 {dimension_numbers = #tpu.dot_dimension_numbers<[1], [0], [0], [1], [0, 0, 1, 1], [], []>} : vector<16x16xf32>, vector<16x16xf32>, vector<16x16xf32> -> vector<16x16xf32>
    %60 = arith.mulf %48, %48 : vector<16x16xf32>
    %61 = arith.mulf %50, %50 : vector<16x16xf32>
    %62 = arith.mulf %48, %50 : vector<16x16xf32>
    %63 = arith.subf %53, %60 : vector<16x16xf32>
    %64 = arith.subf %56, %61 : vector<16x16xf32>
    %65 = arith.subf %59, %62 : vector<16x16xf32>
    %cst_39 = arith.constant 2.000000e+00 : f32
    %66 = vector.broadcast %cst_39 : f32 to vector<16x16xf32>
    %67 = arith.mulf %66, %62 : vector<16x16xf32>
    %cst_40 = arith.constant 9.99999974E-5 : f32
    %68 = vector.broadcast %cst_40 : f32 to vector<16x16xf32>
    %69 = arith.addf %67, %68 : vector<16x16xf32>
    %cst_41 = arith.constant 2.000000e+00 : f32
    %70 = vector.broadcast %cst_41 : f32 to vector<16x16xf32>
    %71 = arith.mulf %70, %65 : vector<16x16xf32>
    %cst_42 = arith.constant 8.99999984E-4 : f32
    %72 = vector.broadcast %cst_42 : f32 to vector<16x16xf32>
    %73 = arith.addf %71, %72 : vector<16x16xf32>
    %74 = arith.mulf %69, %73 : vector<16x16xf32>
    %75 = arith.addf %60, %61 : vector<16x16xf32>
    %cst_43 = arith.constant 9.99999974E-5 : f32
    %76 = vector.broadcast %cst_43 : f32 to vector<16x16xf32>
    %77 = arith.addf %75, %76 : vector<16x16xf32>
    %78 = arith.addf %63, %64 : vector<16x16xf32>
    %cst_44 = arith.constant 8.99999984E-4 : f32
    %79 = vector.broadcast %cst_44 : f32 to vector<16x16xf32>
    %80 = arith.addf %78, %79 : vector<16x16xf32>
    %81 = arith.mulf %77, %80 : vector<16x16xf32>
    %82 = tpu.reciprocal %81 {approx = true} : vector<16x16xf32> -> vector<16x16xf32>
    %83 = arith.mulf %74, %82 : vector<16x16xf32>
    %84 = arith.addf %42, %83 : vector<16x16xf32>
    %cst_45 = arith.constant dense<0.000000e+00> : vector<16xf32>
    %85 = vector.multi_reduction <add>, %84, %cst_45 [0] : vector<16x16xf32> to vector<16xf32>
    %86 = vector.shape_cast %85 : vector<16xf32> to vector<1x16xf32>
    %87 = vector.shape_cast %86 : vector<1x16xf32> to vector<1x1x16xf32>
    %c0_46 = arith.constant 0 : index
    %c0_47 = arith.constant 0 : index
    %c0_48 = arith.constant 0 : index
    %88 = vector.load %arg5[%c0_46, %c0_47, %c0_48] : memref<1x1x16xf32, #tpu.memory_space<vmem>>, vector<1x1x16xf32>
    tpu.vector_store %arg5[%c0_46, %c0_47, %c0_48], %87 {strides = array<i32>} : memref<1x1x16xf32, #tpu.memory_space<vmem>>, vector<1x1x16xf32>,
    return
  }
  func.func @transform_0(%arg0: i32) -> (i32, i32, i32) {
    %c0_i32 = arith.constant 0 : i32
    %c0_i32_0 = arith.constant 0 : i32
    %c0_i32_1 = arith.constant 0 : i32
    return %arg0, %c0_i32, %c0_i32_0 : i32, i32, i32
  }
  func.func @transform_1(%arg0: i32) -> (i32, i32, i32) {
    %c0_i32 = arith.constant 0 : i32
    %c0_i32_0 = arith.constant 0 : i32
    %c0_i32_1 = arith.constant 0 : i32
    return %arg0, %c0_i32, %c0_i32_0 : i32, i32, i32
  }
  func.func @transform_2(%arg0: i32) -> (i32, i32) {
    %c0_i32 = arith.constant 0 : i32
    %c0_i32_0 = arith.constant 0 : i32
    %c0_i32_1 = arith.constant 0 : i32
    return %c0_i32, %c0_i32_0 : i32, i32
  }
  func.func @transform_3(%arg0: i32) -> (i32, i32) {
    %c0_i32 = arith.constant 0 : i32
    %c0_i32_0 = arith.constant 0 : i32
    %c0_i32_1 = arith.constant 0 : i32
    return %c0_i32, %c0_i32_0 : i32, i32
  }
  func.func @transform_4(%arg0: i32) -> (i32, i32, i32) {
    %c0_i32 = arith.constant 0 : i32
    %c0_i32_0 = arith.constant 0 : i32
    %c0_i32_1 = arith.constant 0 : i32
    return %arg0, %c0_i32, %c0_i32_0 : i32, i32, i32
  }
}

</mosaic_0001>

<llo_original>
// kernel: tpu_custom_call.1
$region0: #{tpu_custom_call.1}
  #allocation0 [shape = 'u32[]', space=smem, size = 0x4, offset = 0x4, fixed_abs, tag = 'smem constant byte address 0x4 - core index']
  #allocation1 [shape = 'u32[72,128]{1,0:T(1,128)}', space=vmem, size = 0x9000, scoped, tag = 'internal scratch']
  %s0 = inlined_call_operand.hbm [shape: f32[8,16,16], index: 0, kind: input, shape index: {}]
  %s1 = inlined_call_operand.hbm [shape: f32[8,16,16], index: 1, kind: input, shape index: {}]
  %s2 = inlined_call_operand.hbm [shape: f32[16,16], index: 2, kind: input, shape index: {}]
  %s3 = inlined_call_operand.hbm [shape: f32[16,16], index: 3, kind: input, shape index: {}]
  %s4 = inlined_call_operand.hbm [shape: f32[4,1,16], index: 4, kind: output, shape index: {}]
  %s5 = sld [smem:[#allocation0]]
  $region65: #{tpu_custom_call.1} parent=0
    _
  %s7 = ssub.s32 1, %s5
  %s8 = scalar_select 0, %s7, %s5
  $region1: #{tpu_custom_call.1} parent=0
    #allocation2 [shape = 'u8[32768]{0}', space=vmem, size = 0x8000, scoped, tag = 'input window, operand 0']
    #allocation3 [shape = 's32[2]{0}', space=sflag, size = 0x8, scoped, tag = 'scoped memory for tpu_custom_call.1']
    #allocation4 [shape = 's32[2]{0}', space=sflag, size = 0x8, scoped, tag = 'scoped memory for tpu_custom_call.1']
    #allocation5 [shape = 'u8[32768]{0}', space=vmem, size = 0x8000, scoped, tag = 'input window, operand 1']
    #allocation6 [shape = 's32[2]{0}', space=sflag, size = 0x8, scoped, tag = 'scoped memory for tpu_custom_call.1']
    #allocation7 [shape = 'u8[8192]{0}', space=vmem, size = 0x2000, scoped, tag = 'input window, operand 2, single buffered']
    #allocation8 [shape = 'u8[8192]{0}', space=vmem, size = 0x2000, scoped, tag = 'input window, operand 3, single buffered']
    #allocation9 [shape = 's32[1]{0}', space=sflag, size = 0x4, scoped, tag = 'scoped memory for tpu_custom_call.1']
    #allocation10 [shape = 'u8[1024]{0}', space=vmem, size = 0x400, scoped, tag = 'output window, operand 0']
    %9 = vsyncpa [#allocation3], 0
    %s10 = scalar_lea.sflag [#allocation3], 1
    %11 = vsyncpa %s10, 0
    %12 = vsyncpa [#allocation6], 0
    %s13 = scalar_lea.sflag [#allocation6], 1
    %14 = vsyncpa %s13, 0
    %15 = vsyncpa [#allocation9], 0
    %16 = vsyncpa [#allocation4], 0
    %s17 = scalar_lea.sflag [#allocation4], 1
    %18 = vsyncpa %s17, 0
    loop: start=0, step=1, limit=6
    $region2: #{tpu_custom_call.1} parent=1 // loop_pre_header
      _
    $region3: #{tpu_custom_call.1} parent=1 // loop_header
      %s20 = sphi 0, %s24
      %p21 = scmp.ge.s32.totalorder %s20, 6
      %s30 = sphi 0, %s32
      %s33 = sphi 0, %s30
      %s34 = sphi 0, %s33
      %s50 = sphi 0, %s34
      %s56 = sphi 0, %s58
      %s59 = sphi 0, %s56
      %s60 = sphi 0, %s59
      %s76 = sphi 0, %s60
      %s80 = sphi 0, %s80
      %s82 = sphi 0, %s80
      %s83 = sphi 0, %s82
      %s97 = sphi 0, %s83
      %s101 = sphi 0, %s101
      %s103 = sphi 0, %s101
      %s104 = sphi 0, %s103
      %s118 = sphi 0, %s104
      %s124 = sphi 0, %s126
      %s127 = sphi 0, %s124
      %s128 = sphi 0, %s127
      %s144 = sphi 0, %s128
    $region4: #{tpu_custom_call.1} parent=1 // loop_header_branch
      %23 = sbr.rel (%p21) target = $region8
    $region5: #{tpu_custom_call.1} parent=1 // loop_body
      %s25 = ssub.s32 %s20, 1
      %s26 = ssub.s32 %s20, 2
      %s27 = sadd.s32 %s20, 1
      %s28 = ssub.s32 %s20, %s27
      %p29 = scmp.eq.s32.totalorder %s28, 0
      %s31 = sadd.s32 %s30, 1
      %s32 = scalar_select %p29, %s30, %s31
      %p35 = pneg %p29
      %p36 = scmp.eq.s32.totalorder %s20, 3
      %p37 = por %p35, %p36
      %p38 = scmp.ne.s32.totalorder %s30, %s33
      %p39 = scmp.eq.s32.totalorder %s20, 0
      %p40 = por %p38, %p39
      %p41 = scmp.ne.s32.totalorder %s30, %s33
      %p42 = scmp.eq.s32.totalorder %s25, 3
      %p43 = por %p41, %p42
      %p44 = scmp.ne.s32.totalorder %s33, %s34
      %p45 = scmp.eq.s32.totalorder %s25, 0
      %p46 = por %p44, %p45
      %p47 = scmp.ne.s32.totalorder %s33, %s34
      %p48 = scmp.eq.s32.totalorder %s26, 3
      %p49 = por %p47, %p48
      %p51 = scmp.ne.s32.totalorder %s34, %s50
      %p52 = scmp.eq.s32.totalorder %s26, 0
      %p53 = por %p51, %p52
      %s54 = ssub.s32 %s20, %s27
      %p55 = scmp.eq.s32.totalorder %s54, 0
      %s57 = sadd.s32 %s56, 1
      %s58 = scalar_select %p55, %s56, %s57
      %p61 = pneg %p55
      %p62 = scmp.eq.s32.totalorder %s20, 3
      %p63 = por %p61, %p62
      %p64 = scmp.ne.s32.totalorder %s56, %s59
      %p65 = scmp.eq.s32.totalorder %s20, 0
      %p66 = por %p64, %p65
      %p67 = scmp.ne.s32.totalorder %s56, %s59
      %p68 = scmp.eq.s32.totalorder %s25, 3
      %p69 = por %p67, %p68
      %p70 = scmp.ne.s32.totalorder %s59, %s60
      %p71 = scmp.eq.s32.totalorder %s25, 0
      %p72 = por %p70, %p71
      %p73 = scmp.ne.s32.totalorder %s59, %s60
      %p74 = scmp.eq.s32.totalorder %s26, 3
      %p75 = por %p73, %p74
      %p77 = scmp.ne.s32.totalorder %s60, %s76
      %p78 = scmp.eq.s32.totalorder %s26, 0
      %p79 = por %p77, %p78
      %s81 = sadd.s32 %s80, 1
      %p84 = scmp.eq.s32.totalorder %s20, 3
      %p85 = scmp.ne.s32.totalorder %s80, %s82
      %p86 = scmp.eq.s32.totalorder %s20, 0
      %p87 = por %p85, %p86
      %p88 = scmp.ne.s32.totalorder %s80, %s82
      %p89 = scmp.eq.s32.totalorder %s25, 3
      %p90 = por %p88, %p89
      %p91 = scmp.ne.s32.totalorder %s82, %s83
      %p92 = scmp.eq.s32.totalorder %s25, 0
      %p93 = por %p91, %p92
      %p94 = scmp.ne.s32.totalorder %s82, %s83
      %p95 = scmp.eq.s32.totalorder %s26, 3
      %p96 = por %p94, %p95
      %p98 = scmp.ne.s32.totalorder %s83, %s97
      %p99 = scmp.eq.s32.totalorder %s26, 0
      %p100 = por %p98, %p99
      %s102 = sadd.s32 %s101, 1
      %p105 = scmp.eq.s32.totalorder %s20, 3
      %p106 = scmp.ne.s32.totalorder %s101, %s103
      %p107 = scmp.eq.s32.totalorder %s20, 0
      %p108 = por %p106, %p107
      %p109 = scmp.ne.s32.totalorder %s101, %s103
      %p110 = scmp.eq.s32.totalorder %s25, 3
      %p111 = por %p109, %p110
      %p112 = scmp.ne.s32.totalorder %s103, %s104
      %p113 = scmp.eq.s32.totalorder %s25, 0
      %p114 = por %p112, %p113
      %p115 = scmp.ne.s32.totalorder %s103, %s104
      %p116 = scmp.eq.s32.totalorder %s26, 3
      %p117 = por %p115, %p116
      %p119 = scmp.ne.s32.totalorder %s104, %s118
      %p120 = scmp.eq.s32.totalorder %s26, 0
      %p121 = por %p119, %p120
      %s122 = ssub.s32 %s20, %s27
      %p123 = scmp.eq.s32.totalorder %s122, 0
      %s125 = sadd.s32 %s124, 1
      %s126 = scalar_select %p123, %s124, %s125
      %p129 = pneg %p123
      %p130 = scmp.eq.s32.totalorder %s20, 3
      %p131 = por %p129, %p130
      %p132 = scmp.ne.s32.totalorder %s124, %s127
      %p133 = scmp.eq.s32.totalorder %s20, 0
      %p134 = por %p132, %p133
      %p135 = scmp.ne.s32.totalorder %s124, %s127
      %p136 = scmp.eq.s32.totalorder %s25, 3
      %p137 = por %p135, %p136
      %p138 = scmp.ne.s32.totalorder %s127, %s128
      %p139 = scmp.eq.s32.totalorder %s25, 0
      %p140 = por %p138, %p139
      %p141 = scmp.ne.s32.totalorder %s127, %s128
      %p142 = scmp.eq.s32.totalorder %s26, 3
      %p143 = por %p141, %p142
      %p145 = scmp.ne.s32.totalorder %s128, %s144
      %p146 = scmp.eq.s32.totalorder %s26, 0
      %p147 = por %p145, %p146
      %p148 = scmp.le.s32.totalorder 1, %s20
      %p149 = scmp.lt.s32.totalorder %s20, 5
      %p150 = pnand %p148, %p149
      %p151 = pneg %p150
      // Predicated region
      $region9: #{tpu_custom_call.1} parent=5 // pred_check
        _
      $region10: #{tpu_custom_call.1} parent=5 // pred_check_branch
        %153 = sbr.rel (%p150) target = $region12
      $region11: #{tpu_custom_call.1} parent=5 // pred_region
        %s154 = ssub.s32 %s20, 1
        // Predicated region
        $region13: #{tpu_custom_call.1} parent=11 // pred_check
          %p155 = pneg %p93
        $region14: #{tpu_custom_call.1} parent=11 // pred_check_branch
          %157 = sbr.rel (%p155) target = $region16
        $region15: #{tpu_custom_call.1} parent=11 // pred_region
          %159 = vsyncadd [#allocation6], 0
          %s160 = sshll.u32 %s2, 4
          %s161 = int_to_ptr.hbm [resolvable:$true] %s160
          %s162 = sshll.u32 [#allocation7], 4
          %s163 = int_to_ptr.vmem [resolvable:$true] %s162
          %168 = dma.hbm_to_vmem [thread:$0]  %s161, 256, %s163, [#allocation6], 128, 128, 8
        $region16: #{tpu_custom_call.1} parent=11 // pred_fallthru
          _
        // Predicated region
        $region17: #{tpu_custom_call.1} parent=11 // pred_check
          %p169 = pneg %p114
        $region18: #{tpu_custom_call.1} parent=11 // pred_check_branch
          %171 = sbr.rel (%p169) target = $region20
        $region19: #{tpu_custom_call.1} parent=11 // pred_region
          %173 = vsyncadd [#allocation9], 0
          %s174 = sshll.u32 %s3, 4
          %s175 = int_to_ptr.hbm [resolvable:$true] %s174
          %s176 = sshll.u32 [#allocation8], 4
          %s177 = int_to_ptr.vmem [resolvable:$true] %s176
          %182 = dma.hbm_to_vmem [thread:$0]  %s175, 256, %s177, [#allocation9], 128, 128, 8
        $region20: #{tpu_custom_call.1} parent=11 // pred_fallthru
          _
      $region12: #{tpu_custom_call.1} parent=5 // pred_fallthru
        _
      %p183 = scmp.lt.s32.totalorder %s20, 4
      // Predicated region
      $region21: #{tpu_custom_call.1} parent=5 // pred_check
        %p184 = pneg %p183
      $region22: #{tpu_custom_call.1} parent=5 // pred_check_branch
        %186 = sbr.rel (%p184) target = $region24
      $region23: #{tpu_custom_call.1} parent=5 // pred_region
        // Predicated region
        $region25: #{tpu_custom_call.1} parent=23 // pred_check
          %p187 = pneg %p40
        $region26: #{tpu_custom_call.1} parent=23 // pred_check_branch
          %189 = sbr.rel (%p187) target = $region28
        $region27: #{tpu_custom_call.1} parent=23 // pred_region
          %s190 = sand.u32 %s30, 1
          %s191 = scalar_lea.sflag [#allocation3], %s190
          %s192 = sand.u32 %s30, 1
          %s193 = smul.addr %s192, 32
          %s194 = scalar_lea.vmem [#allocation2], %s193
          %s195 = smul.u32 2, %s20
          %197 = vsyncadd %s191, 0
          %s198 = smul.addr %s195, 2
          %s199 = smul.addr %s198, 8
          %s200 = scalar_lea.hbm %s0, %s199
          %s201 = sshll.u32 %s200, 4
          %s202 = int_to_ptr.hbm [resolvable:$true] %s201
          %s203 = sshll.u32 %s194, 4
          %s204 = int_to_ptr.vmem [resolvable:$true] %s203
          %209 = dma.hbm_to_vmem [thread:$0]  %s202, 512, %s204, %s191, 128, 128, 8
        $region28: #{tpu_custom_call.1} parent=23 // pred_fallthru
          _
        // Predicated region
        $region29: #{tpu_custom_call.1} parent=23 // pred_check
          %p210 = pneg %p66
        $region30: #{tpu_custom_call.1} parent=23 // pred_check_branch
          %212 = sbr.rel (%p210) target = $region32
        $region31: #{tpu_custom_call.1} parent=23 // pred_region
          %s213 = sand.u32 %s20, 1
          %s214 = scalar_lea.sflag [#allocation6], %s213
          %s215 = sand.u32 %s56, 1
          %s216 = smul.addr %s215, 32
          %s217 = scalar_lea.vmem [#allocation5], %s216
          %s218 = smul.u32 2, %s20
          %220 = vsyncadd %s214, 0
          %s221 = smul.addr %s218, 2
          %s222 = smul.addr %s221, 8
          %s223 = scalar_lea.hbm %s1, %s222
          %s224 = sshll.u32 %s223, 4
          %s225 = int_to_ptr.hbm [resolvable:$true] %s224
          %s226 = sshll.u32 %s217, 4
          %s227 = int_to_ptr.vmem [resolvable:$true] %s226
          %232 = dma.hbm_to_vmem [thread:$0]  %s225, 512, %s227, %s214, 128, 128, 8
        $region32: #{tpu_custom_call.1} parent=23 // pred_fallthru
          _
      $region24: #{tpu_custom_call.1} parent=5 // pred_fallthru
        _
      %p233 = scmp.le.s32.totalorder 1, %s20
      %p234 = scmp.lt.s32.totalorder %s20, 5
      %p235 = pnand %p233, %p234
      %p236 = pneg %p235
      // Predicated region
      $region33: #{tpu_custom_call.1} parent=5 // pred_check
        _
      $region34: #{tpu_custom_call.1} parent=5 // pred_check_branch
        %238 = sbr.rel (%p235) target = $region36
      $region35: #{tpu_custom_call.1} parent=5 // pred_region
        %s239 = ssub.s32 %s20, 1
        %s240 = sand.u32 %s33, 1
        %s241 = scalar_lea.sflag [#allocation3], %s240
        %s242 = sand.u32 %s33, 1
        %s243 = smul.addr %s242, 32
        %s244 = scalar_lea.vmem [#allocation2], %s243
        // Predicated region
        $region37: #{tpu_custom_call.1} parent=35 // pred_check
          %p245 = pneg %p46
        $region38: #{tpu_custom_call.1} parent=35 // pred_check_branch
          %247 = sbr.rel (%p245) target = $region40
        $region39: #{tpu_custom_call.1} parent=35 // pred_region
          %249 = dma.done %s241, 512
        $region40: #{tpu_custom_call.1} parent=35 // pred_fallthru
          _
        %s250 = sand.u32 %s25, 1
        %s251 = scalar_lea.sflag [#allocation6], %s250
        %s252 = sand.u32 %s59, 1
        %s253 = smul.addr %s252, 32
        %s254 = scalar_lea.vmem [#allocation5], %s253
        // Predicated region
        $region41: #{tpu_custom_call.1} parent=35 // pred_check
          %p255 = pneg %p72
        $region42: #{tpu_custom_call.1} parent=35 // pred_check_branch
          %257 = sbr.rel (%p255) target = $region44
        $region43: #{tpu_custom_call.1} parent=35 // pred_region
          %259 = dma.done %s251, 512
        $region44: #{tpu_custom_call.1} parent=35 // pred_fallthru
          _
        // Predicated region
        $region45: #{tpu_custom_call.1} parent=35 // pred_check
          %p260 = pneg %p93
        $region46: #{tpu_custom_call.1} parent=35 // pred_check_branch
          %262 = sbr.rel (%p260) target = $region48
        $region47: #{tpu_custom_call.1} parent=35 // pred_region
          %264 = dma.done [#allocation6], 256
        $region48: #{tpu_custom_call.1} parent=35 // pred_fallthru
          _
        // Predicated region
        $region49: #{tpu_custom_call.1} parent=35 // pred_check
          %p265 = pneg %p114
        $region50: #{tpu_custom_call.1} parent=35 // pred_check_branch
          %267 = sbr.rel (%p265) target = $region52
        $region51: #{tpu_custom_call.1} parent=35 // pred_region
          %269 = dma.done [#allocation9], 256
        $region52: #{tpu_custom_call.1} parent=35 // pred_fallthru
          _
        %s270 = sand.u32 %s33, 1
        %s271 = scalar_lea.sflag [#allocation3], %s270
        %s272 = sand.u32 %s33, 1
        %s273 = smul.addr %s272, 32
        %s274 = scalar_lea.vmem [#allocation2], %s273
        %p275 = pneg %p46
        %p276 = pneg %p43
        %s277 = sand.u32 %s25, 1
        %s278 = scalar_lea.sflag [#allocation6], %s277
        %s279 = sand.u32 %s59, 1
        %s280 = smul.addr %s279, 32
        %s281 = scalar_lea.vmem [#allocation5], %s280
        %p282 = pneg %p72
        %p283 = pneg %p69
        %p284 = pneg %p93
        %p285 = pneg %p90
        %p286 = pneg %p114
        %p287 = pneg %p111
        %p288 = pneg %p140
        %p289 = pneg %p137
        %s290 = sand.u32 %s127, 1
        %s291 = scalar_lea.sflag [#allocation4], %s290
        %s292 = sand.u32 %s127, 1
        %s293 = scalar_lea.vmem [#allocation10], %s292
        %s294 = smul.u32 2, %s25
        %s295 = smul.u32 2, %s25
        %v296 = vld [vmem:[#allocation7] sm:$0xff]
        %v297 = vld [vmem:[#allocation7 + $0x8] sm:$0xff]
        %v298 = vld [vmem:[#allocation8] sm:$0xff]
        %v299 = vld [vmem:[#allocation8 + $0x8] sm:$0xff]
        %v300 = vld [vmem:[%s244] sm:$0xff]
        %v301 = vld [vmem:[%s244 + $0x8] sm:$0xff]
        %v302 = vld [vmem:[%s254] sm:$0xff]
        %v303 = vld [vmem:[%s254 + $0x8] sm:$0xff]
        %vm304 = vcmask 130048
        %v306 = vsel %vm304, %v300, 0
        %v309 = vsel %vm304, %v301, 0
        %311 = vmatpush.msra.mxu0 0.0
        %312 = vmatpush.msra.mxu0 0.0
        %313 = vmatpush.msra.mxu0 0.0
        %314 = vmatpush.msra.mxu0 0.0
        %315 = vmatpush.msra.mxu0 0.0
        %316 = vmatpush.msra.mxu0 0.0
        %317 = vmatpush.msra.mxu0 0.0
        %318 = vmatpush.msra.mxu0 0.0
        %319 = vmatpush.msra.mxu0 0.0
        %320 = vmatpush.msra.mxu0 0.0
        %321 = vmatpush.msra.mxu0 0.0
        %322 = vmatpush.msra.mxu0 0.0
        %323 = vmatpush.msra.mxu0 0.0
        %324 = vmatpush.msra.mxu0 0.0
        %325 = vmatpush.msra.mxu0 %v297
        %326 = vmatpush.msra.mxu0 %v296
        %327 = vmatmul.f32.gmra.mxu0 %v306
        %v328 = vpop.f32.mrf.mxu0
        %v329 = vadd.f32 0.0, %v328
        %330 = vmatmul.f32.gmra.mxu0 %v309
        %v331 = vpop.f32.mrf.mxu0
        %v332 = vadd.f32 0.0, %v331
        %333 = vdwg.mxu0
        %v335 = vsel %vm304, %v298, 0
        %v338 = vsel %vm304, %v299, 0
        %340 = vmatpush.msra.mxu0 0.0
        %341 = vmatpush.msra.mxu0 0.0
        %342 = vmatpush.msra.mxu0 0.0
        %343 = vmatpush.msra.mxu0 0.0
        %344 = vmatpush.msra.mxu0 0.0
        %345 = vmatpush.msra.mxu0 0.0
        %346 = vmatpush.msra.mxu0 0.0
        %347 = vmatpush.msra.mxu0 0.0
        %348 = vmatpush.msra.mxu0 0.0
        %349 = vmatpush.msra.mxu0 0.0
        %350 = vmatpush.msra.mxu0 0.0
        %351 = vmatpush.msra.mxu0 0.0
        %352 = vmatpush.msra.mxu0 0.0
        %353 = vmatpush.msra.mxu0 0.0
        %354 = vmatpush.msra.mxu0 %v332
        %355 = vmatpush.msra.mxu0 %v329
        %356 = vmatmul.f32.gmra.mxu0 %v335
        %v357 = vpop.f32.mrf.mxu0
        %v358 = vadd.f32 0.0, %v357
        %359 = vmatmul.f32.gmra.mxu0 %v338
        %v360 = vpop.f32.mrf.mxu0
        %v361 = vadd.f32 0.0, %v360
        %362 = vdwg.mxu0
        %v364 = vsel %vm304, %v302, 0
        %v367 = vsel %vm304, %v303, 0
        %369 = vmatpush.msra.mxu0 0.0
        %370 = vmatpush.msra.mxu0 0.0
        %371 = vmatpush.msra.mxu0 0.0
        %372 = vmatpush.msra.mxu0 0.0
        %373 = vmatpush.msra.mxu0 0.0
        %374 = vmatpush.msra.mxu0 0.0
        %375 = vmatpush.msra.mxu0 0.0
        %376 = vmatpush.msra.mxu0 0.0
        %377 = vmatpush.msra.mxu0 0.0
        %378 = vmatpush.msra.mxu0 0.0
        %379 = vmatpush.msra.mxu0 0.0
        %380 = vmatpush.msra.mxu0 0.0
        %381 = vmatpush.msra.mxu0 0.0
        %382 = vmatpush.msra.mxu0 0.0
        %383 = vmatpush.msra.mxu0 %v297
        %384 = vmatpush.msra.mxu0 %v296
        %385 = vmatmul.f32.gmra.mxu0 %v364
        %v386 = vpop.f32.mrf.mxu0
        %v387 = vadd.f32 0.0, %v386
        %388 = vmatmul.f32.gmra.mxu0 %v367
        %v389 = vpop.f32.mrf.mxu0
        %v390 = vadd.f32 0.0, %v389
        %391 = vdwg.mxu0
        %392 = vmatpush.msra.mxu0 0.0
        %393 = vmatpush.msra.mxu0 0.0
        %394 = vmatpush.msra.mxu0 0.0
        %395 = vmatpush.msra.mxu0 0.0
        %396 = vmatpush.msra.mxu0 0.0
        %397 = vmatpush.msra.mxu0 0.0
        %398 = vmatpush.msra.mxu0 0.0
        %399 = vmatpush.msra.mxu0 0.0
        %400 = vmatpush.msra.mxu0 0.0
        %401 = vmatpush.msra.mxu0 0.0
        %402 = vmatpush.msra.mxu0 0.0
        %403 = vmatpush.msra.mxu0 0.0
        %404 = vmatpush.msra.mxu0 0.0
        %405 = vmatpush.msra.mxu0 0.0
        %406 = vmatpush.msra.mxu0 %v390
        %407 = vmatpush.msra.mxu0 %v387
        %408 = vmatmul.f32.gmra.mxu0 %v335
        %v409 = vpop.f32.mrf.mxu0
        %v410 = vadd.f32 0.0, %v409
        %411 = vmatmul.f32.gmra.mxu0 %v338
        %v412 = vpop.f32.mrf.mxu0
        %v413 = vadd.f32 0.0, %v412
        %414 = vdwg.mxu0
        %v415 = vmul.f32 %v300, %v300
        %v416 = vmul.f32 %v301, %v301
        %v418 = vsel %vm304, %v415, 0
        %v421 = vsel %vm304, %v416, 0
        %423 = vmatpush.msra.mxu0 0.0
        %424 = vmatpush.msra.mxu0 0.0
        %425 = vmatpush.msra.mxu0 0.0
        %426 = vmatpush.msra.mxu0 0.0
        %427 = vmatpush.msra.mxu0 0.0
        %428 = vmatpush.msra.mxu0 0.0
        %429 = vmatpush.msra.mxu0 0.0
        %430 = vmatpush.msra.mxu0 0.0
        %431 = vmatpush.msra.mxu0 0.0
        %432 = vmatpush.msra.mxu0 0.0
        %433 = vmatpush.msra.mxu0 0.0
        %434 = vmatpush.msra.mxu0 0.0
        %435 = vmatpush.msra.mxu0 0.0
        %436 = vmatpush.msra.mxu0 0.0
        %437 = vmatpush.msra.mxu0 %v297
        %438 = vmatpush.msra.mxu0 %v296
        %439 = vmatmul.f32.gmra.mxu0 %v418
        %v440 = vpop.f32.mrf.mxu0
        %v441 = vadd.f32 0.0, %v440
        %442 = vmatmul.f32.gmra.mxu0 %v421
        %v443 = vpop.f32.mrf.mxu0
        %v444 = vadd.f32 0.0, %v443
        %445 = vdwg.mxu0
        %446 = vmatpush.msra.mxu0 0.0
        %447 = vmatpush.msra.mxu0 0.0
        %448 = vmatpush.msra.mxu0 0.0
        %449 = vmatpush.msra.mxu0 0.0
        %450 = vmatpush.msra.mxu0 0.0
        %451 = vmatpush.msra.mxu0 0.0
        %452 = vmatpush.msra.mxu0 0.0
        %453 = vmatpush.msra.mxu0 0.0
        %454 = vmatpush.msra.mxu0 0.0
        %455 = vmatpush.msra.mxu0 0.0
        %456 = vmatpush.msra.mxu0 0.0
        %457 = vmatpush.msra.mxu0 0.0
        %458 = vmatpush.msra.mxu0 0.0
        %459 = vmatpush.msra.mxu0 0.0
        %460 = vmatpush.msra.mxu0 %v444
        %461 = vmatpush.msra.mxu0 %v441
        %462 = vmatmul.f32.gmra.mxu0 %v335
        %v463 = vpop.f32.mrf.mxu0
        %v464 = vadd.f32 0.0, %v463
        %465 = vmatmul.f32.gmra.mxu0 %v338
        %v466 = vpop.f32.mrf.mxu0
        %v467 = vadd.f32 0.0, %v466
        %468 = vdwg.mxu0
        %v469 = vmul.f32 %v302, %v302
        %v470 = vmul.f32 %v303, %v303
        %v472 = vsel %vm304, %v469, 0
        %v475 = vsel %vm304, %v470, 0
        %477 = vmatpush.msra.mxu0 0.0
        %478 = vmatpush.msra.mxu0 0.0
        %479 = vmatpush.msra.mxu0 0.0
        %480 = vmatpush.msra.mxu0 0.0
        %481 = vmatpush.msra.mxu0 0.0
        %482 = vmatpush.msra.mxu0 0.0
        %483 = vmatpush.msra.mxu0 0.0
        %484 = vmatpush.msra.mxu0 0.0
        %485 = vmatpush.msra.mxu0 0.0
        %486 = vmatpush.msra.mxu0 0.0
        %487 = vmatpush.msra.mxu0 0.0
        %488 = vmatpush.msra.mxu0 0.0
        %489 = vmatpush.msra.mxu0 0.0
        %490 = vmatpush.msra.mxu0 0.0
        %491 = vmatpush.msra.mxu0 %v297
        %492 = vmatpush.msra.mxu0 %v296
        %493 = vmatmul.f32.gmra.mxu0 %v472
        %v494 = vpop.f32.mrf.mxu0
        %v495 = vadd.f32 0.0, %v494
        %496 = vmatmul.f32.gmra.mxu0 %v475
        %v497 = vpop.f32.mrf.mxu0
        %v498 = vadd.f32 0.0, %v497
        %499 = vdwg.mxu0
        %500 = vmatpush.msra.mxu0 0.0
        %501 = vmatpush.msra.mxu0 0.0
        %502 = vmatpush.msra.mxu0 0.0
        %503 = vmatpush.msra.mxu0 0.0
        %504 = vmatpush.msra.mxu0 0.0
        %505 = vmatpush.msra.mxu0 0.0
        %506 = vmatpush.msra.mxu0 0.0
        %507 = vmatpush.msra.mxu0 0.0
        %508 = vmatpush.msra.mxu0 0.0
        %509 = vmatpush.msra.mxu0 0.0
        %510 = vmatpush.msra.mxu0 0.0
        %511 = vmatpush.msra.mxu0 0.0
        %512 = vmatpush.msra.mxu0 0.0
        %513 = vmatpush.msra.mxu0 0.0
        %514 = vmatpush.msra.mxu0 %v498
        %515 = vmatpush.msra.mxu0 %v495
        %516 = vmatmul.f32.gmra.mxu0 %v335
        %v517 = vpop.f32.mrf.mxu0
        %v518 = vadd.f32 0.0, %v517
        %519 = vmatmul.f32.gmra.mxu0 %v338
        %v520 = vpop.f32.mrf.mxu0
        %v521 = vadd.f32 0.0, %v520
        %522 = vdwg.mxu0
        %v523 = vmul.f32 %v300, %v302
        %v524 = vmul.f32 %v301, %v303
        %v526 = vsel %vm304, %v523, 0
        %v529 = vsel %vm304, %v524, 0
        %531 = vmatpush.msra.mxu0 0.0
        %532 = vmatpush.msra.mxu0 0.0
        %533 = vmatpush.msra.mxu0 0.0
        %534 = vmatpush.msra.mxu0 0.0
        %535 = vmatpush.msra.mxu0 0.0
        %536 = vmatpush.msra.mxu0 0.0
        %537 = vmatpush.msra.mxu0 0.0
        %538 = vmatpush.msra.mxu0 0.0
        %539 = vmatpush.msra.mxu0 0.0
        %540 = vmatpush.msra.mxu0 0.0
        %541 = vmatpush.msra.mxu0 0.0
        %542 = vmatpush.msra.mxu0 0.0
        %543 = vmatpush.msra.mxu0 0.0
        %544 = vmatpush.msra.mxu0 0.0
        %545 = vmatpush.msra.mxu0 %v297
        %546 = vmatpush.msra.mxu0 %v296
        %547 = vmatmul.f32.gmra.mxu0 %v526
        %v548 = vpop.f32.mrf.mxu0
        %v549 = vadd.f32 0.0, %v548
        %550 = vmatmul.f32.gmra.mxu0 %v529
        %v551 = vpop.f32.mrf.mxu0
        %v552 = vadd.f32 0.0, %v551
        %553 = vdwg.mxu0
        %554 = vmatpush.msra.mxu0 0.0
        %555 = vmatpush.msra.mxu0 0.0
        %556 = vmatpush.msra.mxu0 0.0
        %557 = vmatpush.msra.mxu0 0.0
        %558 = vmatpush.msra.mxu0 0.0
        %559 = vmatpush.msra.mxu0 0.0
        %560 = vmatpush.msra.mxu0 0.0
        %561 = vmatpush.msra.mxu0 0.0
        %562 = vmatpush.msra.mxu0 0.0
        %563 = vmatpush.msra.mxu0 0.0
        %564 = vmatpush.msra.mxu0 0.0
        %565 = vmatpush.msra.mxu0 0.0
        %566 = vmatpush.msra.mxu0 0.0
        %567 = vmatpush.msra.mxu0 0.0
        %568 = vmatpush.msra.mxu0 %v552
        %569 = vmatpush.msra.mxu0 %v549
        %570 = vmatmul.f32.gmra.mxu0 %v335
        %v571 = vpop.f32.mrf.mxu0
        %v572 = vadd.f32 0.0, %v571
        %573 = vmatmul.f32.gmra.mxu0 %v338
        %v574 = vpop.f32.mrf.mxu0
        %v575 = vadd.f32 0.0, %v574
        %576 = vdwg.mxu0
        %v577 = vmul.f32 %v358, %v358
        %v578 = vmul.f32 %v361, %v361
        %v579 = vmul.f32 %v410, %v410
        %v580 = vmul.f32 %v413, %v413
        %v581 = vmul.f32 %v358, %v410
        %v582 = vmul.f32 %v361, %v413
        %v583 = vsub.f32 %v464, %v577
        %v584 = vsub.f32 %v467, %v578
        %v585 = vsub.f32 %v518, %v579
        %v586 = vsub.f32 %v521, %v580
        %v587 = vsub.f32 %v572, %v581
        %v588 = vsub.f32 %v575, %v582
        %v589 = vmul.f32 %v581, 2.0
        %v590 = vmul.f32 %v582, 2.0
        %v591 = vadd.f32 %v589, 0.0001
        %v592 = vadd.f32 %v590, 0.0001
        %v593 = vmul.f32 %v587, 2.0
        %v594 = vmul.f32 %v588, 2.0
        %v595 = vadd.f32 %v593, 0.0009
        %v596 = vadd.f32 %v594, 0.0009
        %v597 = vmul.f32 %v591, %v595
        %v598 = vmul.f32 %v592, %v596
        %v599 = vadd.f32 %v577, %v579
        %v600 = vadd.f32 %v578, %v580
        %v601 = vadd.f32 %v599, 0.0001
        %v602 = vadd.f32 %v600, 0.0001
        %v603 = vadd.f32 %v583, %v585
        %v604 = vadd.f32 %v584, %v586
        %v605 = vadd.f32 %v603, 0.0009
        %v606 = vadd.f32 %v604, 0.0009
        %v607 = vmul.f32 %v601, %v605
        %v608 = vmul.f32 %v602, %v606
        %v609 = vrcp.pop %v607
        %v610 = vrcp.pop %v608
        %v611 = vmul.f32 %v597, %v609
        %v612 = vmul.f32 %v598, %v610
        %s613 = scalar_lea.vmem %s244, 16 [#allocation2]
        %v614 = vld [vmem:[%s613] sm:$0xff]
        %v615 = vld [vmem:[%s613 + $0x8] sm:$0xff]
        %s616 = scalar_lea.vmem %s254, 16 [#allocation5]
        %v617 = vld [vmem:[%s616] sm:$0xff]
        %v618 = vld [vmem:[%s616 + $0x8] sm:$0xff]
        %v620 = vsel %vm304, %v614, 0
        %v623 = vsel %vm304, %v615, 0
        %625 = vmatpush.msra.mxu0 0.0
        %626 = vmatpush.msra.mxu0 0.0
        %627 = vmatpush.msra.mxu0 0.0
        %628 = vmatpush.msra.mxu0 0.0
        %629 = vmatpush.msra.mxu0 0.0
        %630 = vmatpush.msra.mxu0 0.0
        %631 = vmatpush.msra.mxu0 0.0
        %632 = vmatpush.msra.mxu0 0.0
        %633 = vmatpush.msra.mxu0 0.0
        %634 = vmatpush.msra.mxu0 0.0
        %635 = vmatpush.msra.mxu0 0.0
        %636 = vmatpush.msra.mxu0 0.0
        %637 = vmatpush.msra.mxu0 0.0
        %638 = vmatpush.msra.mxu0 0.0
        %639 = vmatpush.msra.mxu0 %v297
        %640 = vmatpush.msra.mxu0 %v296
        %641 = vmatmul.f32.gmra.mxu0 %v620
        %v642 = vpop.f32.mrf.mxu0
        %v643 = vadd.f32 0.0, %v642
        %644 = vmatmul.f32.gmra.mxu0 %v623
        %v645 = vpop.f32.mrf.mxu0
        %v646 = vadd.f32 0.0, %v645
        %647 = vdwg.mxu0
        %648 = vmatpush.msra.mxu0 0.0
        %649 = vmatpush.msra.mxu0 0.0
        %650 = vmatpush.msra.mxu0 0.0
        %651 = vmatpush.msra.mxu0 0.0
        %652 = vmatpush.msra.mxu0 0.0
        %653 = vmatpush.msra.mxu0 0.0
        %654 = vmatpush.msra.mxu0 0.0
        %655 = vmatpush.msra.mxu0 0.0
        %656 = vmatpush.msra.mxu0 0.0
        %657 = vmatpush.msra.mxu0 0.0
        %658 = vmatpush.msra.mxu0 0.0
        %659 = vmatpush.msra.mxu0 0.0
        %660 = vmatpush.msra.mxu0 0.0
        %661 = vmatpush.msra.mxu0 0.0
        %662 = vmatpush.msra.mxu0 %v646
        %663 = vmatpush.msra.mxu0 %v643
        %664 = vmatmul.f32.gmra.mxu0 %v335
        %v665 = vpop.f32.mrf.mxu0
        %v666 = vadd.f32 0.0, %v665
        %667 = vmatmul.f32.gmra.mxu0 %v338
        %v668 = vpop.f32.mrf.mxu0
        %v669 = vadd.f32 0.0, %v668
        %670 = vdwg.mxu0
        %v672 = vsel %vm304, %v617, 0
        %v675 = vsel %vm304, %v618, 0
        %677 = vmatpush.msra.mxu0 0.0
        %678 = vmatpush.msra.mxu0 0.0
        %679 = vmatpush.msra.mxu0 0.0
        %680 = vmatpush.msra.mxu0 0.0
        %681 = vmatpush.msra.mxu0 0.0
        %682 = vmatpush.msra.mxu0 0.0
        %683 = vmatpush.msra.mxu0 0.0
        %684 = vmatpush.msra.mxu0 0.0
        %685 = vmatpush.msra.mxu0 0.0
        %686 = vmatpush.msra.mxu0 0.0
        %687 = vmatpush.msra.mxu0 0.0
        %688 = vmatpush.msra.mxu0 0.0
        %689 = vmatpush.msra.mxu0 0.0
        %690 = vmatpush.msra.mxu0 0.0
        %691 = vmatpush.msra.mxu0 %v297
        %692 = vmatpush.msra.mxu0 %v296
        %693 = vmatmul.f32.gmra.mxu0 %v672
        %v694 = vpop.f32.mrf.mxu0
        %v695 = vadd.f32 0.0, %v694
        %696 = vmatmul.f32.gmra.mxu0 %v675
        %v697 = vpop.f32.mrf.mxu0
        %v698 = vadd.f32 0.0, %v697
        %699 = vdwg.mxu0
        %700 = vmatpush.msra.mxu0 0.0
        %701 = vmatpush.msra.mxu0 0.0
        %702 = vmatpush.msra.mxu0 0.0
        %703 = vmatpush.msra.mxu0 0.0
        %704 = vmatpush.msra.mxu0 0.0
        %705 = vmatpush.msra.mxu0 0.0
        %706 = vmatpush.msra.mxu0 0.0
        %707 = vmatpush.msra.mxu0 0.0
        %708 = vmatpush.msra.mxu0 0.0
        %709 = vmatpush.msra.mxu0 0.0
        %710 = vmatpush.msra.mxu0 0.0
        %711 = vmatpush.msra.mxu0 0.0
        %712 = vmatpush.msra.mxu0 0.0
        %713 = vmatpush.msra.mxu0 0.0
        %714 = vmatpush.msra.mxu0 %v698
        %715 = vmatpush.msra.mxu0 %v695
        %716 = vmatmul.f32.gmra.mxu0 %v335
        %v717 = vpop.f32.mrf.mxu0
        %v718 = vadd.f32 0.0, %v717
        %719 = vmatmul.f32.gmra.mxu0 %v338
        %v720 = vpop.f32.mrf.mxu0
        %v721 = vadd.f32 0.0, %v720
        %722 = vdwg.mxu0
        %v723 = vmul.f32 %v614, %v614
        %v724 = vmul.f32 %v615, %v615
        %v726 = vsel %vm304, %v723, 0
        %v729 = vsel %vm304, %v724, 0
        %731 = vmatpush.msra.mxu0 0.0
        %732 = vmatpush.msra.mxu0 0.0
        %733 = vmatpush.msra.mxu0 0.0
        %734 = vmatpush.msra.mxu0 0.0
        %735 = vmatpush.msra.mxu0 0.0
        %736 = vmatpush.msra.mxu0 0.0
        %737 = vmatpush.msra.mxu0 0.0
        %738 = vmatpush.msra.mxu0 0.0
        %739 = vmatpush.msra.mxu0 0.0
        %740 = vmatpush.msra.mxu0 0.0
        %741 = vmatpush.msra.mxu0 0.0
        %742 = vmatpush.msra.mxu0 0.0
        %743 = vmatpush.msra.mxu0 0.0
        %744 = vmatpush.msra.mxu0 0.0
        %745 = vmatpush.msra.mxu0 %v297
        %746 = vmatpush.msra.mxu0 %v296
        %747 = vmatmul.f32.gmra.mxu0 %v726
        %v748 = vpop.f32.mrf.mxu0
        %v749 = vadd.f32 0.0, %v748
        %750 = vmatmul.f32.gmra.mxu0 %v729
        %v751 = vpop.f32.mrf.mxu0
        %v752 = vadd.f32 0.0, %v751
        %753 = vdwg.mxu0
        %754 = vmatpush.msra.mxu0 0.0
        %755 = vmatpush.msra.mxu0 0.0
        %756 = vmatpush.msra.mxu0 0.0
        %757 = vmatpush.msra.mxu0 0.0
        %758 = vmatpush.msra.mxu0 0.0
        %759 = vmatpush.msra.mxu0 0.0
        %760 = vmatpush.msra.mxu0 0.0
        %761 = vmatpush.msra.mxu0 0.0
        %762 = vmatpush.msra.mxu0 0.0
        %763 = vmatpush.msra.mxu0 0.0
        %764 = vmatpush.msra.mxu0 0.0
        %765 = vmatpush.msra.mxu0 0.0
        %766 = vmatpush.msra.mxu0 0.0
        %767 = vmatpush.msra.mxu0 0.0
        %768 = vmatpush.msra.mxu0 %v752
        %769 = vmatpush.msra.mxu0 %v749
        %770 = vmatmul.f32.gmra.mxu0 %v335
        %v771 = vpop.f32.mrf.mxu0
        %v772 = vadd.f32 0.0, %v771
        %773 = vmatmul.f32.gmra.mxu0 %v338
        %v774 = vpop.f32.mrf.mxu0
        %v775 = vadd.f32 0.0, %v774
        %776 = vdwg.mxu0
        %v777 = vmul.f32 %v617, %v617
        %v778 = vmul.f32 %v618, %v618
        %v780 = vsel %vm304, %v777, 0
        %v783 = vsel %vm304, %v778, 0
        %785 = vmatpush.msra.mxu0 0.0
        %786 = vmatpush.msra.mxu0 0.0
        %787 = vmatpush.msra.mxu0 0.0
        %788 = vmatpush.msra.mxu0 0.0
        %789 = vmatpush.msra.mxu0 0.0
        %790 = vmatpush.msra.mxu0 0.0
        %791 = vmatpush.msra.mxu0 0.0
        %792 = vmatpush.msra.mxu0 0.0
        %793 = vmatpush.msra.mxu0 0.0
        %794 = vmatpush.msra.mxu0 0.0
        %795 = vmatpush.msra.mxu0 0.0
        %796 = vmatpush.msra.mxu0 0.0
        %797 = vmatpush.msra.mxu0 0.0
        %798 = vmatpush.msra.mxu0 0.0
        %799 = vmatpush.msra.mxu0 %v297
        %800 = vmatpush.msra.mxu0 %v296
        %801 = vmatmul.f32.gmra.mxu0 %v780
        %v802 = vpop.f32.mrf.mxu0
        %v803 = vadd.f32 0.0, %v802
        %804 = vmatmul.f32.gmra.mxu0 %v783
        %v805 = vpop.f32.mrf.mxu0
        %v806 = vadd.f32 0.0, %v805
        %807 = vdwg.mxu0
        %808 = vmatpush.msra.mxu0 0.0
        %809 = vmatpush.msra.mxu0 0.0
        %810 = vmatpush.msra.mxu0 0.0
        %811 = vmatpush.msra.mxu0 0.0
        %812 = vmatpush.msra.mxu0 0.0
        %813 = vmatpush.msra.mxu0 0.0
        %814 = vmatpush.msra.mxu0 0.0
        %815 = vmatpush.msra.mxu0 0.0
        %816 = vmatpush.msra.mxu0 0.0
        %817 = vmatpush.msra.mxu0 0.0
        %818 = vmatpush.msra.mxu0 0.0
        %819 = vmatpush.msra.mxu0 0.0
        %820 = vmatpush.msra.mxu0 0.0
        %821 = vmatpush.msra.mxu0 0.0
        %822 = vmatpush.msra.mxu0 %v806
        %823 = vmatpush.msra.mxu0 %v803
        %824 = vmatmul.f32.gmra.mxu0 %v335
        %v825 = vpop.f32.mrf.mxu0
        %v826 = vadd.f32 0.0, %v825
        %827 = vmatmul.f32.gmra.mxu0 %v338
        %v828 = vpop.f32.mrf.mxu0
        %v829 = vadd.f32 0.0, %v828
        %830 = vdwg.mxu0
        %v831 = vmul.f32 %v614, %v617
        %v832 = vmul.f32 %v615, %v618
        %v834 = vsel %vm304, %v831, 0
        %v837 = vsel %vm304, %v832, 0
        %839 = vmatpush.msra.mxu0 0.0
        %840 = vmatpush.msra.mxu0 0.0
        %841 = vmatpush.msra.mxu0 0.0
        %842 = vmatpush.msra.mxu0 0.0
        %843 = vmatpush.msra.mxu0 0.0
        %844 = vmatpush.msra.mxu0 0.0
        %845 = vmatpush.msra.mxu0 0.0
        %846 = vmatpush.msra.mxu0 0.0
        %847 = vmatpush.msra.mxu0 0.0
        %848 = vmatpush.msra.mxu0 0.0
        %849 = vmatpush.msra.mxu0 0.0
        %850 = vmatpush.msra.mxu0 0.0
        %851 = vmatpush.msra.mxu0 0.0
        %852 = vmatpush.msra.mxu0 0.0
        %853 = vmatpush.msra.mxu0 %v297
        %854 = vmatpush.msra.mxu0 %v296
        %855 = vmatmul.f32.gmra.mxu0 %v834
        %v856 = vpop.f32.mrf.mxu0
        %v857 = vadd.f32 0.0, %v856
        %858 = vmatmul.f32.gmra.mxu0 %v837
        %v859 = vpop.f32.mrf.mxu0
        %v860 = vadd.f32 0.0, %v859
        %861 = vdwg.mxu0
        %862 = vmatpush.msra.mxu0 0.0
        %863 = vmatpush.msra.mxu0 0.0
        %864 = vmatpush.msra.mxu0 0.0
        %865 = vmatpush.msra.mxu0 0.0
        %866 = vmatpush.msra.mxu0 0.0
        %867 = vmatpush.msra.mxu0 0.0
        %868 = vmatpush.msra.mxu0 0.0
        %869 = vmatpush.msra.mxu0 0.0
        %870 = vmatpush.msra.mxu0 0.0
        %871 = vmatpush.msra.mxu0 0.0
        %872 = vmatpush.msra.mxu0 0.0
        %873 = vmatpush.msra.mxu0 0.0
        %874 = vmatpush.msra.mxu0 0.0
        %875 = vmatpush.msra.mxu0 0.0
        %876 = vmatpush.msra.mxu0 %v860
        %877 = vmatpush.msra.mxu0 %v857
        %878 = vmatmul.f32.gmra.mxu0 %v335
        %v879 = vpop.f32.mrf.mxu0
        %v880 = vadd.f32 0.0, %v879
        %881 = vmatmul.f32.gmra.mxu0 %v338
        %v882 = vpop.f32.mrf.mxu0
        %v883 = vadd.f32 0.0, %v882
        %884 = vdwg.mxu0
        %v885 = vmul.f32 %v666, %v666
        %v886 = vmul.f32 %v669, %v669
        %v887 = vmul.f32 %v718, %v718
        %v888 = vmul.f32 %v721, %v721
        %v889 = vmul.f32 %v666, %v718
        %v890 = vmul.f32 %v669, %v721
        %v891 = vsub.f32 %v772, %v885
        %v892 = vsub.f32 %v775, %v886
        %v893 = vsub.f32 %v826, %v887
        %v894 = vsub.f32 %v829, %v888
        %v895 = vsub.f32 %v880, %v889
        %v896 = vsub.f32 %v883, %v890
        %v897 = vmul.f32 %v889, 2.0
        %v898 = vmul.f32 %v890, 2.0
        %v899 = vadd.f32 %v897, 0.0001
        %v900 = vadd.f32 %v898, 0.0001
        %v901 = vmul.f32 %v895, 2.0
        %v902 = vmul.f32 %v896, 2.0
        %v903 = vadd.f32 %v901, 0.0009
        %v904 = vadd.f32 %v902, 0.0009
        %v905 = vmul.f32 %v899, %v903
        %v906 = vmul.f32 %v900, %v904
        %v907 = vadd.f32 %v885, %v887
        %v908 = vadd.f32 %v886, %v888
        %v909 = vadd.f32 %v907, 0.0001
        %v910 = vadd.f32 %v908, 0.0001
        %v911 = vadd.f32 %v891, %v893
        %v912 = vadd.f32 %v892, %v894
        %v913 = vadd.f32 %v911, 0.0009
        %v914 = vadd.f32 %v912, 0.0009
        %v915 = vmul.f32 %v909, %v913
        %v916 = vmul.f32 %v910, %v914
        %v917 = vrcp.pop %v915
        %v918 = vrcp.pop %v916
        %v919 = vmul.f32 %v905, %v917
        %v920 = vmul.f32 %v906, %v918
        %v921 = vadd.f32 %v611, %v919
        %v922 = vadd.f32 %v612, %v920
        %v923 = vsel %vm304, %v921, 0.0
        %v924 = vsel %vm304, %v922, 0.0
        %v925 = vadd.f32 %v923, %v924
        %v926 = vrot.slane %v925, 4
        %v927 = vadd.f32 %v925, %v926
        %v928 = vrot.slane %v927, 2
        %v929 = vadd.f32 %v927, %v928
        %v930 = vrot.slane %v929, 1
        %v931 = vadd.f32 %v929, %v930
        %vm932 = vcmask 122880
        %933 = vst.msk [vmem:[%s293] sm:$0x1] %vm932, %v931
        %s934 = sand.u32 %s127, 1
        %s935 = scalar_lea.sflag [#allocation4], %s934
        %s936 = sand.u32 %s127, 1
        %s937 = scalar_lea.vmem [#allocation10], %s936
        // Predicated region
        $region53: #{tpu_custom_call.1} parent=35 // pred_check
          %p938 = pneg %p137
        $region54: #{tpu_custom_call.1} parent=35 // pred_check_branch
          %940 = sbr.rel (%p938) target = $region56
        $region55: #{tpu_custom_call.1} parent=35 // pred_region
          %942 = vsyncadd %s935, 0
          %s943 = scalar_lea.hbm %s4, %s25
          %s945 = sshll.u32 %s937, 4
          %s946 = int_to_ptr.vmem [resolvable:$true] %s945
          %s947 = sshll.u32 %s943, 4
          %s948 = int_to_ptr.hbm [resolvable:$true] %s947
          %950 = dma.vmem_to_hbm [thread:$0]  %s946, 16, %s948, %s935
        $region56: #{tpu_custom_call.1} parent=35 // pred_fallthru
          _
      $region36: #{tpu_custom_call.1} parent=5 // pred_fallthru
        _
      %p951 = scmp.le.s32.totalorder 2, %s20
      // Predicated region
      $region57: #{tpu_custom_call.1} parent=5 // pred_check
        %p952 = pneg %p951
      $region58: #{tpu_custom_call.1} parent=5 // pred_check_branch
        %954 = sbr.rel (%p952) target = $region60
      $region59: #{tpu_custom_call.1} parent=5 // pred_region
        %s955 = ssub.s32 %s20, 2
        // Predicated region
        $region61: #{tpu_custom_call.1} parent=59 // pred_check
          %p956 = pneg %p143
        $region62: #{tpu_custom_call.1} parent=59 // pred_check_branch
          %958 = sbr.rel (%p956) target = $region64
        $region63: #{tpu_custom_call.1} parent=59 // pred_region
          %s959 = sand.u32 %s128, 1
          %s960 = scalar_lea.sflag [#allocation4], %s959
          %s961 = sand.u32 %s128, 1
          %s962 = scalar_lea.vmem [#allocation10], %s961
          %964 = dma.done %s960, 16
        $region64: #{tpu_custom_call.1} parent=59 // pred_fallthru
          _
      $region60: #{tpu_custom_call.1} parent=5 // pred_fallthru
        _
    $region6: #{tpu_custom_call.1} parent=1 // loop_footer
      %s24 = sadd.s32 1, %s20
    $region7: #{tpu_custom_call.1} parent=1 // loop_footer_branch
      %19 = sbr.rel target = $region3
    $region8: #{tpu_custom_call.1} parent=1 // loop_exit
      _
    %965 = vsyncpa [#allocation3], 1
    %s966 = scalar_lea.sflag [#allocation3], 1
    %967 = vsyncpa %s966, 1
    %968 = vsyncpa [#allocation6], 1
    %s969 = scalar_lea.sflag [#allocation6], 1
    %970 = vsyncpa %s969, 1
    %971 = vsyncpa [#allocation9], 1
    %972 = vsyncpa [#allocation4], 1
    %s973 = scalar_lea.sflag [#allocation4], 1
    %974 = vsyncpa %s973, 1

</llo_original>
